<compile_context>
chip_gen: v7x
topology: tpu7x:2x2x1
jax: 0.10.0
libtpu: 0.0.40
codegen_flags: <defaults>
</compile_context>

<pallas_src>
import functools

import jax
import jax.numpy as jnp
from jax import lax
from jax.experimental import pallas as pl
from jax.experimental.pallas import tpu as pltpu


def router_kernel(p_ref, wc_ref, bc_ref, w1_ref, b1_ref, w2_ref, b2_ref, out_ref):
    TNP, _ = p_ref.shape            # (TN * OH*OW, KH*KW*Cin)
    TN = out_ref.shape[0]           # samples in this grid step
    P = TNP // TN                   # spatial positions per sample (OH*OW)

    # Conv2d(valid) + bias + ReLU as a single im2col matmul, f32 accumulation.
    y = jnp.dot(p_ref[...], wc_ref[...], preferred_element_type=jnp.float32)
    y = jnp.maximum(y + bc_ref[...], 0.0)                          # (TN*P, F)

    # Global average pool per sample via a block-diagonal averaging matmul
    # (keeps data in place, uses the otherwise idle MXU slot instead of an
    # XLU cross-sublane reduce + relayout).
    rows = lax.broadcasted_iota(jnp.int32, (TN, TNP), 0)
    cols = lax.broadcasted_iota(jnp.int32, (TN, TNP), 1)
    lo = rows * P
    avg = jnp.where((cols >= lo) & (cols < lo + P), 1.0 / P, 0.0)
    pooled = jnp.dot(avg, y, preferred_element_type=jnp.float32)   # (TN, F)

    # fc1 + ReLU   (dropout p=0.0 / eval mode -> identity)
    h = jnp.dot(pooled, w1_ref[...], preferred_element_type=jnp.float32) + b1_ref[...]
    h = jnp.maximum(h, 0.0)

    # fc2 + sigmoid (soft_decision=True branch of output_controller)
    logit = jnp.dot(h, w2_ref[...], preferred_element_type=jnp.float32) + b2_ref[...]
    out_ref[...] = jax.nn.sigmoid(logit)


def _pick_block_batch(n, p, target_rows=2048):
    """Largest batch block TN that divides N, keeps TN*P patch rows modest and
    keeps BlockSpec shapes tile-aligned (safe for bf16's (16,128) packing)."""
    best = None
    for tn in range(1, n + 1):
        if n % tn:
            continue
        aligned = (tn == n) or ((tn * p) % 16 == 0 and tn % 8 == 0)
        if aligned and tn * p <= max(target_rows, p):
            best = tn
    return best if best is not None else n


def router_forward(x_nchw, params, compute_dtype=jnp.float32):
    """x_nchw: (N, Cin, H, W) float32. Returns sigmoid routing probs, shape (N,)."""
    wc, bc, w1, b1, w2, b2 = params
    KH, KW, Cin, F = wc.shape
    N, C, H, W = x_nchw.shape
    assert C == Cin
    OH, OW = H - KH + 1, W - KW + 1
    P = OH * OW
    Kd = KH * KW * Cin
    hidden = w1.shape[1]

    # im2col in the wrapper: under jit the NCHW->NHWC permutation fuses into
    # the same gather pass that builds the patches (no standalone transpose op),
    # and the kernel sees a lane-dense (.., Kd) last axis instead of C=4.
    x = jnp.transpose(x_nchw, (0, 2, 3, 1))                        # NHWC view
    cols = [x[:, kh:kh + OH, kw:kw + OW, :]
            for kh in range(KH) for kw in range(KW)]
    patches = jnp.concatenate(cols, axis=-1)                       # (N, OH, OW, Kd)
    patches = patches.reshape(N * P, Kd).astype(compute_dtype)
    wc_flat = wc.reshape(Kd, F).astype(compute_dtype)              # (kh,kw,c) order matches patches

    TN = _pick_block_batch(N, P)
    grid = (N // TN,)

    out = pl.pallas_call(
        router_kernel,
        out_shape=jax.ShapeDtypeStruct((N, 1), jnp.float32),
        grid=grid,
        in_specs=[
            pl.BlockSpec((TN * P, Kd), lambda n: (n, 0)),          # patches (pipelined over batch)
            pl.BlockSpec((Kd, F), lambda n: (0, 0)),               # conv weight (full, resident)
            pl.BlockSpec((1, F), lambda n: (0, 0)),                # conv bias
            pl.BlockSpec((F, hidden), lambda n: (0, 0)),           # fc1 weight
            pl.BlockSpec((1, hidden), lambda n: (0, 0)),           # fc1 bias
            pl.BlockSpec((hidden, 1), lambda n: (0, 0)),           # fc2 weight
            pl.BlockSpec((1, 1), lambda n: (0, 0)),                # fc2 bias
        ],
        out_specs=pl.BlockSpec((TN, 1), lambda n: (n, 0)),
        compiler_params=pltpu.CompilerParams(
            dimension_semantics=("parallel",),                     # 2-TC sharding on v7x
            vmem_limit_bytes=32 * 1024 * 1024,                     # explicit (v5e default = 16 MiB)
        ),
    )(patches, wc_flat, bc, w1, b1, w2, b2)
    return out[:, 0]                                               # .squeeze() of the (N, 1) fc2 output


def init_params(key, input_nc, ngf, kernel_size, reduction_rate):
    hidden = ngf // reduction_rate + 1   # nn.Linear(ngf, ngf / reduction_rate + 1), py2 int div
    k_conv_w, k_conv_b, k_fc1_w, k_fc1_b, k_fc2_w, k_fc2_b = jax.random.split(key, 6)
    # PyTorch conv weight is (ngf, Cin, KH, KW); store as (KH, KW, Cin, ngf).
    wc = 0.1 * jax.random.normal(k_conv_w, (kernel_size, kernel_size, input_nc, ngf), jnp.float32)
    bc = 0.1 * jax.random.normal(k_conv_b, (1, ngf), jnp.float32)
    # PyTorch fc weight is (out, in); store as (in, out).
    w1 = 0.1 * jax.random.normal(k_fc1_w, (ngf, hidden), jnp.float32)
    b1 = 0.1 * jax.random.normal(k_fc1_b, (1, hidden), jnp.float32)
    w2 = 0.1 * jax.random.normal(k_fc2_w, (hidden, 1), jnp.float32)
    b2 = 0.1 * jax.random.normal(k_fc2_b, (1, 1), jnp.float32)
    return wc, bc, w1, b1, w2, b2


def reference_forward(x_nchw, params):
    """Pure-JAX reference mirroring the PyTorch forward (NCHW conv, f32)."""
    wc, bc, w1, b1, w2, b2 = params
    w_oihw = jnp.transpose(wc, (3, 2, 0, 1))                       # (Cout, Cin, KH, KW)
    y = lax.conv_general_dilated(
        x_nchw.astype(jnp.float32), w_oihw, window_strides=(1, 1), padding="VALID",
        dimension_numbers=("NCHW", "OIHW", "NCHW"))
    y = y + bc[0][None, :, None, None]
    y = jnp.maximum(y, 0.0)
    y = y.mean(axis=-1).mean(axis=-1)                              # GAP -> (N, ngf)
    h = jnp.maximum(y @ w1 + b1, 0.0)
    logit = (h @ w2 + b2)[:, 0]
    return jax.nn.sigmoid(logit)


if __name__ == "__main__":
    N, C, H, W = 2, 4, 16, 16
    ngf, kernel_size, reduction_rate = 10, 3, 2

    key = jax.random.PRNGKey(0)
    k_x, k_p = jax.random.split(key)
    x = jax.random.normal(k_x, (N, C, H, W), jnp.float32)
    params = init_params(k_p, C, ngf, kernel_size, reduction_rate)

    fwd_f32 = jax.jit(functools.partial(router_forward, compute_dtype=jnp.float32))
    fwd_bf16 = jax.jit(functools.partial(router_forward, compute_dtype=jnp.bfloat16))

    ref = jax.block_until_ready(reference_forward(x, params))

    out = jax.block_until_ready(fwd_f32(x, params))
    assert out.shape == (N,), out.shape
    assert jnp.allclose(out, ref, atol=2e-5, rtol=2e-5), (out, ref)

    # bf16 HBM-traffic path (f32 accumulation) — looser tolerance vs f32 reference.
    out_bf16 = jax.block_until_ready(fwd_bf16(x, params))
    assert jnp.allclose(out_bf16, ref, atol=3e-2, rtol=3e-2), (out_bf16, ref)

    print("KERNEL_OK")
</pallas_src>

<mosaic_0001>
module attributes {stable_mosaic.version = 11 : i64} {
  func.func @router_kernel(%arg0: i32, %arg1: memref<392x36xf32, #tpu.memory_space<vmem>>, %arg2: memref<36x10xf32, #tpu.memory_space<vmem>>, %arg3: memref<1x10xf32, #tpu.memory_space<vmem>>, %arg4: memref<10x6xf32, #tpu.memory_space<vmem>>, %arg5: memref<1x6xf32, #tpu.memory_space<vmem>>, %arg6: memref<6x1xf32, #tpu.memory_space<vmem>>, %arg7: memref<1x1xf32, #tpu.memory_space<vmem>>, %arg8: memref<2x1xf32, #tpu.memory_space<vmem>>) attributes {dimension_semantics = [#tpu.dimension_semantics<parallel>], iteration_bounds = array<i64: 1>, scalar_prefetch = 0 : i64, scratch_operands = 0 : i64, tpu.core_type = #tpu.core_type<tc>, window_params = [{transform_indices = @transform_0, window_bounds = array<i64: 392, 36>}, {pipeline_mode = #tpu.pipeline_mode<synchronous>, transform_indices = @transform_1, window_bounds = array<i64: 36, 10>}, {pipeline_mode = #tpu.pipeline_mode<synchronous>, transform_indices = @transform_2, window_bounds = array<i64: 1, 10>}, {pipeline_mode = #tpu.pipeline_mode<synchronous>, transform_indices = @transform_3, window_bounds = array<i64: 10, 6>}, {pipeline_mode = #tpu.pipeline_mode<synchronous>, transform_indices = @transform_4, window_bounds = array<i64: 1, 6>}, {pipeline_mode = #tpu.pipeline_mode<synchronous>, transform_indices = @transform_5, window_bounds = array<i64: 6, 1>}, {pipeline_mode = #tpu.pipeline_mode<synchronous>, transform_indices = @transform_6, window_bounds = array<i64: 1, 1>}, {transform_indices = @transform_7, window_bounds = array<i64: 2, 1>}]} {
    %c0 = arith.constant 0 : index
    %c0_0 = arith.constant 0 : index
    %0 = vector.load %arg1[%c0, %c0_0] : memref<392x36xf32, #tpu.memory_space<vmem>>, vector<392x36xf32>
    %c0_1 = arith.constant 0 : index
    %c0_2 = arith.constant 0 : index
    %1 = vector.load %arg2[%c0_1, %c0_2] : memref<36x10xf32, #tpu.memory_space<vmem>>, vector<36x10xf32>
    %cst = arith.constant dense<0.000000e+00> : vector<392x10xf32>
    %2 = tpu.matmul %0, %1, %cst {dimension_numbers = #tpu.dot_dimension_numbers<[1], [0], [0], [1], [0, 0, 1, 1], [], []>} : vector<392x36xf32>, vector<36x10xf32>, vector<392x10xf32> -> vector<392x10xf32>
    %c0_3 = arith.constant 0 : index
    %c0_4 = arith.constant 0 : index
    %3 = vector.load %arg3[%c0_3, %c0_4] : memref<1x10xf32, #tpu.memory_space<vmem>>, vector<1x10xf32>
    %4 = vector.broadcast %3 : vector<1x10xf32> to vector<392x10xf32>
    %5 = arith.addf %2, %4 : vector<392x10xf32>
    %cst_5 = arith.constant 0.000000e+00 : f32
    %6 = vector.broadcast %cst_5 : f32 to vector<392x10xf32>
    %7 = arith.maximumf %5, %6 : vector<392x10xf32>
    %8 = tpu.iota {dimensions = array<i32: 0>} : vector<2x392xi32>
    %9 = tpu.iota {dimensions = array<i32: 1>} : vector<2x392xi32>
    %c196_i32 = arith.constant 196 : i32
    %10 = vector.broadcast %c196_i32 : i32 to vector<2x392xi32>
    %11 = arith.muli %8, %10 : vector<2x392xi32>
    %12 = arith.cmpi sge, %9, %11 : vector<2x392xi32>
    %c196_i32_6 = arith.constant 196 : i32
    %13 = vector.broadcast %c196_i32_6 : i32 to vector<2x392xi32>
    %14 = arith.addi %11, %13 : vector<2x392xi32>
    %15 = arith.cmpi slt, %9, %14 : vector<2x392xi32>
    %16 = arith.andi %12, %15 : vector<2x392xi1>
    %cst_7 = arith.constant 0.00510204071 : f32
    %cst_8 = arith.constant 0.000000e+00 : f32
    %17 = vector.broadcast %cst_7 : f32 to vector<2x392xf32>
    %18 = vector.broadcast %cst_8 : f32 to vector<2x392xf32>
    %19 = arith.select %16, %17, %18 : vector<2x392xi1>, vector<2x392xf32>
    %cst_9 = arith.constant dense<0.000000e+00> : vector<2x10xf32>
    %20 = tpu.matmul %19, %7, %cst_9 {dimension_numbers = #tpu.dot_dimension_numbers<[1], [0], [0], [1], [0, 0, 1, 1], [], []>} : vector<2x392xf32>, vector<392x10xf32>, vector<2x10xf32> -> vector<2x10xf32>
    %c0_10 = arith.constant 0 : index
    %c0_11 = arith.constant 0 : index
    %21 = vector.load %arg4[%c0_10, %c0_11] : memref<10x6xf32, #tpu.memory_space<vmem>>, vector<10x6xf32>
    %cst_12 = arith.constant dense<0.000000e+00> : vector<2x6xf32>
    %22 = tpu.matmul %20, %21, %cst_12 {dimension_numbers = #tpu.dot_dimension_numbers<[1], [0], [0], [1], [0, 0, 1, 1], [], []>} : vector<2x10xf32>, vector<10x6xf32>, vector<2x6xf32> -> vector<2x6xf32>
    %c0_13 = arith.constant 0 : index
    %c0_14 = arith.constant 0 : index
    %23 = vector.load %arg5[%c0_13, %c0_14] : memref<1x6xf32, #tpu.memory_space<vmem>>, vector<1x6xf32>
    %24 = vector.broadcast %23 : vector<1x6xf32> to vector<2x6xf32>
    %25 = arith.addf %22, %24 : vector<2x6xf32>
    %cst_15 = arith.constant 0.000000e+00 : f32
    %26 = vector.broadcast %cst_15 : f32 to vector<2x6xf32>
    %27 = arith.maximumf %25, %26 : vector<2x6xf32>
    %c0_16 = arith.constant 0 : index
    %c0_17 = arith.constant 0 : index
    %28 = vector.load %arg6[%c0_16, %c0_17] : memref<6x1xf32, #tpu.memory_space<vmem>>, vector<6x1xf32>
    %cst_18 = arith.constant dense<0.000000e+00> : vector<2x1xf32>
    %29 = tpu.matmul %27, %28, %cst_18 {dimension_numbers = #tpu.dot_dimension_numbers<[1], [0], [0], [1], [0, 0, 1, 1], [], []>} : vector<2x6xf32>, vector<6x1xf32>, vector<2x1xf32> -> vector<2x1xf32>
    %c0_19 = arith.constant 0 : index
    %c0_20 = arith.constant 0 : index
    %30 = vector.load %arg7[%c0_19, %c0_20] : memref<1x1xf32, #tpu.memory_space<vmem>>, vector<1x1xf32>
    %31 = vector.broadcast %30 : vector<1x1xf32> to vector<2x1xf32>
    %32 = arith.addf %29, %31 : vector<2x1xf32>
    %33 = arith.negf %32 : vector<2x1xf32>
    %34 = math.exp %33 : vector<2x1xf32>
    %cst_21 = arith.constant 1.000000e+00 : f32
    %35 = vector.broadcast %cst_21 : f32 to vector<2x1xf32>
    %36 = arith.addf %35, %34 : vector<2x1xf32>
    %37 = arith.divf %35, %36 : vector<2x1xf32>
    %c0_22 = arith.constant 0 : index
    %c0_23 = arith.constant 0 : index
    %38 = vector.load %arg8[%c0_22, %c0_23] : memref<2x1xf32, #tpu.memory_space<vmem>>, vector<2x1xf32>
    tpu.vector_store %arg8[%c0_22, %c0_23], %37 {strides = array<i32>} : memref<2x1xf32, #tpu.memory_space<vmem>>, vector<2x1xf32>,
    return
  }
  func.func @transform_0(%arg0: i32) -> (i32, i32) {
    %c0_i32 = arith.constant 0 : i32
    %c0_i32_0 = arith.constant 0 : i32
    return %arg0, %c0_i32 : i32, i32
  }
  func.func @transform_1(%arg0: i32) -> (i32, i32) {
    %c0_i32 = arith.constant 0 : i32
    %c0_i32_0 = arith.constant 0 : i32
    %c0_i32_1 = arith.constant 0 : i32
    return %c0_i32, %c0_i32_0 : i32, i32
  }
  func.func @transform_2(%arg0: i32) -> (i32, i32) {
    %c0_i32 = arith.constant 0 : i32
    %c0_i32_0 = arith.constant 0 : i32
    %c0_i32_1 = arith.constant 0 : i32
    return %c0_i32, %c0_i32_0 : i32, i32
  }
  func.func @transform_3(%arg0: i32) -> (i32, i32) {
    %c0_i32 = arith.constant 0 : i32
    %c0_i32_0 = arith.constant 0 : i32
    %c0_i32_1 = arith.constant 0 : i32
    return %c0_i32, %c0_i32_0 : i32, i32
  }
  func.func @transform_4(%arg0: i32) -> (i32, i32) {
    %c0_i32 = arith.constant 0 : i32
    %c0_i32_0 = arith.constant 0 : i32
    %c0_i32_1 = arith.constant 0 : i32
    return %c0_i32, %c0_i32_0 : i32, i32
  }
  func.func @transform_5(%arg0: i32) -> (i32, i32) {
    %c0_i32 = arith.constant 0 : i32
    %c0_i32_0 = arith.constant 0 : i32
    %c0_i32_1 = arith.constant 0 : i32
    return %c0_i32, %c0_i32_0 : i32, i32
  }
  func.func @transform_6(%arg0: i32) -> (i32, i32) {
    %c0_i32 = arith.constant 0 : i32
    %c0_i32_0 = arith.constant 0 : i32
    %c0_i32_1 = arith.constant 0 : i32
    return %c0_i32, %c0_i32_0 : i32, i32
  }
  func.func @transform_7(%arg0: i32) -> (i32, i32) {
    %c0_i32 = arith.constant 0 : i32
    %c0_i32_0 = arith.constant 0 : i32
    return %arg0, %c0_i32 : i32, i32
  }
}

</mosaic_0001>

<llo_original>
// kernel: router_forward.1
$region0: #{router_forward.1}
  #allocation0 [shape = 'u32[]', space=smem, size = 0x4, offset = 0x4, fixed_abs, tag = 'smem constant byte address 0x4 - core index']
  #allocation1 [shape = 'u32[144,128]{1,0:T(1,128)}', space=vmem, size = 0x12000, scoped, tag = 'internal scratch']
  #allocation2 [shape = 'f32[1,1]{1,0:T(1,128)S(1)}', space=vmem, size = 0x200, scoped, tag = 'scoped memory for router_forward.1']
  %s0 = inlined_call_operand.vmem [shape: f32[392,36], index: 0, kind: input, shape index: {}]
  %s1 = inlined_call_operand.vmem [shape: f32[36,10], index: 1, kind: input, shape index: {}]
  %s2 = inlined_call_operand.vmem [shape: f32[1,10], index: 2, kind: input, shape index: {}]
  %s3 = inlined_call_operand.vmem [shape: f32[10,6], index: 3, kind: input, shape index: {}]
  %s4 = inlined_call_operand.vmem [shape: f32[1,6], index: 4, kind: input, shape index: {}]
  %s5 = inlined_call_operand.vmem [shape: f32[6,1], index: 5, kind: input, shape index: {}]
  %s6 = inlined_call_operand.<no memory space> [shape: f32[1,1], index: 6, kind: input, shape index: {}]
  %s7 = inlined_call_operand.vmem [shape: f32[2,1], index: 7, kind: output, shape index: {}]
  %s8 = sld [smem:[#allocation0]]
  $region38: #{router_forward.1} parent=0
    _
  %s10 = ssub.s32 1, %s8
  %s11 = scalar_select 0, %s10, %s8
  %v12 = vstv %s6
  %13 = vst [vmem:[#allocation2] sm:$0x1] %v12
  // Predicated region
  $region2: #{router_forward.1} parent=0 // pred_check
    _
  $region3: #{router_forward.1} parent=0 // pred_check_branch
    %15 = sbr.rel (0) target = $region5
  $region4: #{router_forward.1} parent=0 // pred_region
    _
  $region5: #{router_forward.1} parent=0 // pred_fallthru
    _
  // Predicated region
  $region6: #{router_forward.1} parent=0 // pred_check
    _
  $region7: #{router_forward.1} parent=0 // pred_check_branch
    %17 = sbr.rel (0) target = $region9
  $region8: #{router_forward.1} parent=0 // pred_region
    _
  $region9: #{router_forward.1} parent=0 // pred_fallthru
    _
  // Predicated region
  $region10: #{router_forward.1} parent=0 // pred_check
    _
  $region11: #{router_forward.1} parent=0 // pred_check_branch
    %19 = sbr.rel (0) target = $region13
  $region12: #{router_forward.1} parent=0 // pred_region
    _
  $region13: #{router_forward.1} parent=0 // pred_fallthru
    _
  // Predicated region
  $region14: #{router_forward.1} parent=0 // pred_check
    _
  $region15: #{router_forward.1} parent=0 // pred_check_branch
    %21 = sbr.rel (0) target = $region17
  $region16: #{router_forward.1} parent=0 // pred_region
    _
  $region17: #{router_forward.1} parent=0 // pred_fallthru
    _
  // Predicated region
  $region18: #{router_forward.1} parent=0 // pred_check
    _
  $region19: #{router_forward.1} parent=0 // pred_check_branch
    %23 = sbr.rel (0) target = $region21
  $region20: #{router_forward.1} parent=0 // pred_region
    _
  $region21: #{router_forward.1} parent=0 // pred_fallthru
    _
  // Predicated region
  $region22: #{router_forward.1} parent=0 // pred_check
    _
  $region23: #{router_forward.1} parent=0 // pred_check_branch
    %25 = sbr.rel (0) target = $region25
  $region24: #{router_forward.1} parent=0 // pred_region
    _
  $region25: #{router_forward.1} parent=0 // pred_fallthru
    _
  // Predicated region
  $region26: #{router_forward.1} parent=0 // pred_check
    _
  $region27: #{router_forward.1} parent=0 // pred_check_branch
    %27 = sbr.rel (0) target = $region29
  $region28: #{router_forward.1} parent=0 // pred_region
    _
  $region29: #{router_forward.1} parent=0 // pred_fallthru
    _
  %v28 = vld [vmem:[%s0] sm:$0xff]
  %v29 = vld [vmem:[%s0 + $0x8] sm:$0xff]
  %v30 = vld [vmem:[%s0 + $0x10] sm:$0xff]
  %v31 = vld [vmem:[%s0 + $0x18] sm:$0xff]
  %v32 = vld [vmem:[%s0 + $0x20] sm:$0xff]
  %v33 = vld [vmem:[%s0 + $0x28] sm:$0xff]
  %v34 = vld [vmem:[%s0 + $0x30] sm:$0xff]
  %v35 = vld [vmem:[%s0 + $0x38] sm:$0xff]
  %v36 = vld [vmem:[%s0 + $0x40] sm:$0xff]
  %v37 = vld [vmem:[%s0 + $0x48] sm:$0xff]
  %v38 = vld [vmem:[%s0 + $0x50] sm:$0xff]
  %v39 = vld [vmem:[%s0 + $0x58] sm:$0xff]
  %v40 = vld [vmem:[%s0 + $0x60] sm:$0xff]
  %v41 = vld [vmem:[%s0 + $0x68] sm:$0xff]
  %v42 = vld [vmem:[%s0 + $0x70] sm:$0xff]
  %v43 = vld [vmem:[%s0 + $0x78] sm:$0xff]
  %v44 = vld [vmem:[%s0 + $0x80] sm:$0xff]
  %v45 = vld [vmem:[%s0 + $0x88] sm:$0xff]
  %v46 = vld [vmem:[%s0 + $0x90] sm:$0xff]
  %v47 = vld [vmem:[%s0 + $0x98] sm:$0xff]
  %v48 = vld [vmem:[%s0 + $0xa0] sm:$0xff]
  %v49 = vld [vmem:[%s0 + $0xa8] sm:$0xff]
  %v50 = vld [vmem:[%s0 + $0xb0] sm:$0xff]
  %v51 = vld [vmem:[%s0 + $0xb8] sm:$0xff]
  %v52 = vld [vmem:[%s0 + $0xc0] sm:$0xff]
  %v53 = vld [vmem:[%s0 + $0xc8] sm:$0xff]
  %v54 = vld [vmem:[%s0 + $0xd0] sm:$0xff]
  %v55 = vld [vmem:[%s0 + $0xd8] sm:$0xff]
  %v56 = vld [vmem:[%s0 + $0xe0] sm:$0xff]
  %v57 = vld [vmem:[%s0 + $0xe8] sm:$0xff]
  %v58 = vld [vmem:[%s0 + $0xf0] sm:$0xff]
  %v59 = vld [vmem:[%s0 + $0xf8] sm:$0xff]
  %v60 = vld [vmem:[%s0 + $0x100] sm:$0xff]
  %v61 = vld [vmem:[%s0 + $0x108] sm:$0xff]
  %v62 = vld [vmem:[%s0 + $0x110] sm:$0xff]
  %v63 = vld [vmem:[%s0 + $0x118] sm:$0xff]
  %v64 = vld [vmem:[%s0 + $0x120] sm:$0xff]
  %v65 = vld [vmem:[%s0 + $0x128] sm:$0xff]
  %v66 = vld [vmem:[%s0 + $0x130] sm:$0xff]
  %v67 = vld [vmem:[%s0 + $0x138] sm:$0xff]
  %v68 = vld [vmem:[%s0 + $0x140] sm:$0xff]
  %v69 = vld [vmem:[%s0 + $0x148] sm:$0xff]
  %v70 = vld [vmem:[%s0 + $0x150] sm:$0xff]
  %v71 = vld [vmem:[%s0 + $0x158] sm:$0xff]
  %v72 = vld [vmem:[%s0 + $0x160] sm:$0xff]
  %v73 = vld [vmem:[%s0 + $0x168] sm:$0xff]
  %v74 = vld [vmem:[%s0 + $0x170] sm:$0xff]
  %v75 = vld [vmem:[%s0 + $0x178] sm:$0xff]
  %v76 = vld [vmem:[%s0 + $0x180] sm:$0xff]
  %v77 = vld [vmem:[%s1] sm:$0xff]
  %v78 = vld [vmem:[%s1 + $0x8] sm:$0xff]
  %v79 = vld [vmem:[%s1 + $0x10] sm:$0xff]
  %v80 = vld [vmem:[%s1 + $0x18] sm:$0xff]
  %v81 = vld [vmem:[%s1 + $0x20] sm:$0xf]
  %v82 = vld [vmem:[%s2] sm:$0x1]
  %v84 = vlaneseq
  %v85 = vshrl.u32 %v84, 7
  %v86 = vsub.s32 0, %v85
  %v87 = vrot.slane %v82, %v86
  %vm89 = vcmask 293888
  %v91 = vsel %vm89, %v28, 0
  %v94 = vsel %vm89, %v29, 0
  %v97 = vsel %vm89, %v30, 0
  %v100 = vsel %vm89, %v31, 0
  %v103 = vsel %vm89, %v32, 0
  %v106 = vsel %vm89, %v33, 0
  %v109 = vsel %vm89, %v34, 0
  %v112 = vsel %vm89, %v35, 0
  %v115 = vsel %vm89, %v36, 0
  %v118 = vsel %vm89, %v37, 0
  %v121 = vsel %vm89, %v38, 0
  %v124 = vsel %vm89, %v39, 0
  %v127 = vsel %vm89, %v40, 0
  %v130 = vsel %vm89, %v41, 0
  %v133 = vsel %vm89, %v42, 0
  %v136 = vsel %vm89, %v43, 0
  %v139 = vsel %vm89, %v44, 0
  %v142 = vsel %vm89, %v45, 0
  %v145 = vsel %vm89, %v46, 0
  %v148 = vsel %vm89, %v47, 0
  %v151 = vsel %vm89, %v48, 0
  %v154 = vsel %vm89, %v49, 0
  %v157 = vsel %vm89, %v50, 0
  %v160 = vsel %vm89, %v51, 0
  %v163 = vsel %vm89, %v52, 0
  %v166 = vsel %vm89, %v53, 0
  %v169 = vsel %vm89, %v54, 0
  %v172 = vsel %vm89, %v55, 0
  %v175 = vsel %vm89, %v56, 0
  %v178 = vsel %vm89, %v57, 0
  %v181 = vsel %vm89, %v58, 0
  %v184 = vsel %vm89, %v59, 0
  %v187 = vsel %vm89, %v60, 0
  %v190 = vsel %vm89, %v61, 0
  %v193 = vsel %vm89, %v62, 0
  %v196 = vsel %vm89, %v63, 0
  %v199 = vsel %vm89, %v64, 0
  %v202 = vsel %vm89, %v65, 0
  %v205 = vsel %vm89, %v66, 0
  %v208 = vsel %vm89, %v67, 0
  %v211 = vsel %vm89, %v68, 0
  %v214 = vsel %vm89, %v69, 0
  %v217 = vsel %vm89, %v70, 0
  %v220 = vsel %vm89, %v71, 0
  %v223 = vsel %vm89, %v72, 0
  %v226 = vsel %vm89, %v73, 0
  %v229 = vsel %vm89, %v74, 0
  %v232 = vsel %vm89, %v75, 0
  %v235 = vsel %vm89, %v76, 0
  %vm237 = vcmask 1043456
  %v239 = vsel %vm237, %v81, 0
  %241 = vmatprep.subr.mxu0 0.0
  %242 = vmatpush1.msra.mxu0 %v77
  %243 = vmatprep.subr.mxu0 0.0
  %244 = vmatpush1.msra.mxu0 %v78
  %245 = vmatprep.subr.mxu0 0.0
  %246 = vmatpush1.msra.mxu0 %v79
  %247 = vmatprep.subr.mxu0 0.0
  %248 = vmatpush1.msra.mxu0 %v80
  %249 = vmatprep.subr.mxu0 0.0
  %250 = vmatpush1.msra.mxu0 %v239
  %251 = vmatprep.subr.mxu0 0.0
  %252 = vmatpush1.msra.mxu0 0.0
  %253 = vmatprep.subr.mxu0 0.0
  %254 = vmatpush1.msra.mxu0 0.0
  %255 = vmatprep.subr.mxu0 0.0
  %256 = vmatpush1.msra.mxu0 0.0
  %257 = vmatprep.subr.mxu0 0.0
  %258 = vmatpush1.msra.mxu0 0.0
  %259 = vmatprep.subr.mxu0 0.0
  %260 = vmatpush1.msra.mxu0 0.0
  %261 = vmatprep.subr.mxu0 0.0
  %262 = vmatpush1.msra.mxu0 0.0
  %263 = vmatprep.subr.mxu0 0.0
  %264 = vmatpush1.msra.mxu0 0.0
  %265 = vmatprep.subr.mxu0 0.0
  %266 = vmatpush1.msra.mxu0 0.0
  %267 = vmatprep.subr.mxu0 0.0
  %268 = vmatpush1.msra.mxu0 0.0
  %269 = vmatprep.subr.mxu0 0.0
  %270 = vmatpush1.msra.mxu0 0.0
  %271 = vmatprep.subr.mxu0 0.0
  %272 = vmatpush1.msra.mxu0 0.0
  %273 = vmatprep.subr.mxu0 0.0
  %274 = vmatpush1.msra.mxu0 0.0
  %275 = vmatprep.subr.mxu0 0.0
  %276 = vmatpush1.msra.mxu0 0.0
  %277 = vmatprep.subr.mxu0 0.0
  %278 = vmatpush1.msra.mxu0 0.0
  %279 = vmatprep.subr.mxu0 0.0
  %280 = vmatpush1.msra.mxu0 0.0
  %281 = vmatprep.subr.mxu0 0.0
  %282 = vmatpush1.msra.mxu0 0.0
  %283 = vmatprep.subr.mxu0 0.0
  %284 = vmatpush1.msra.mxu0 0.0
  %285 = vmatprep.subr.mxu0 0.0
  %286 = vmatpush1.msra.mxu0 0.0
  %287 = vmatprep.subr.mxu0 0.0
  %288 = vmatpush1.msra.mxu0 0.0
  %289 = vmatprep.subr.mxu0 0.0
  %290 = vmatpush1.msra.mxu0 0.0
  %291 = vmatprep.subr.mxu0 0.0
  %292 = vmatpush1.msra.mxu0 0.0
  %293 = vmatprep.subr.mxu0 0.0
  %294 = vmatpush1.msra.mxu0 0.0
  %295 = vmatprep.subr.mxu0 0.0
  %296 = vmatpush1.msra.mxu0 0.0
  %297 = vmatprep.subr.mxu0 0.0
  %298 = vmatpush1.msra.mxu0 0.0
  %299 = vmatprep.subr.mxu0 0.0
  %300 = vmatpush1.msra.mxu0 0.0
  %301 = vmatprep.subr.mxu0 0.0
  %302 = vmatpush1.msra.mxu0 0.0
  %303 = vmatprep.subr.mxu0 0.0
  %304 = vmatpush1.msra.mxu0 0.0
  %305 = vmatprep.mubr.f32.mxu0 0.0
  %306 = vmatmul.mubr.f32.gmra.mrb[0].mxu0 %v91
  %v307 = vpop.f32.mrb[0].mxu0
  %v308 = vadd.f32 %v87, %v307
  %v309 = vpop.f32.mrb[0].mxu0
  %310 = vmatprep.mubr.f32.mxu0 0.0
  %311 = vmatmul.mubr.f32.gmra.mrb[0].mxu0 %v94
  %v312 = vpop.f32.mrb[0].mxu0
  %v313 = vadd.f32 %v87, %v312
  %v314 = vpop.f32.mrb[0].mxu0
  %315 = vmatprep.mubr.f32.mxu0 0.0
  %316 = vmatmul.mubr.f32.gmra.mrb[0].mxu0 %v97
  %v317 = vpop.f32.mrb[0].mxu0
  %v318 = vadd.f32 %v87, %v317
  %v319 = vpop.f32.mrb[0].mxu0
  %320 = vmatprep.mubr.f32.mxu0 0.0
  %321 = vmatmul.mubr.f32.gmra.mrb[0].mxu0 %v100
  %v322 = vpop.f32.mrb[0].mxu0
  %v323 = vadd.f32 %v87, %v322
  %v324 = vpop.f32.mrb[0].mxu0
  %325 = vmatprep.mubr.f32.mxu0 0.0
  %326 = vmatmul.mubr.f32.gmra.mrb[0].mxu0 %v103
  %v327 = vpop.f32.mrb[0].mxu0
  %v328 = vadd.f32 %v87, %v327
  %v329 = vpop.f32.mrb[0].mxu0
  %330 = vmatprep.mubr.f32.mxu0 0.0
  %331 = vmatmul.mubr.f32.gmra.mrb[0].mxu0 %v106
  %v332 = vpop.f32.mrb[0].mxu0
  %v333 = vadd.f32 %v87, %v332
  %v334 = vpop.f32.mrb[0].mxu0
  %335 = vmatprep.mubr.f32.mxu0 0.0
  %336 = vmatmul.mubr.f32.gmra.mrb[0].mxu0 %v109
  %v337 = vpop.f32.mrb[0].mxu0
  %v338 = vadd.f32 %v87, %v337
  %v339 = vpop.f32.mrb[0].mxu0
  %340 = vmatprep.mubr.f32.mxu0 0.0
  %341 = vmatmul.mubr.f32.gmra.mrb[0].mxu0 %v112
  %v342 = vpop.f32.mrb[0].mxu0
  %v343 = vadd.f32 %v87, %v342
  %v344 = vpop.f32.mrb[0].mxu0
  %345 = vmatprep.mubr.f32.mxu0 0.0
  %346 = vmatmul.mubr.f32.gmra.mrb[0].mxu0 %v115
  %v347 = vpop.f32.mrb[0].mxu0
  %v348 = vadd.f32 %v87, %v347
  %v349 = vpop.f32.mrb[0].mxu0
  %350 = vmatprep.mubr.f32.mxu0 0.0
  %351 = vmatmul.mubr.f32.gmra.mrb[0].mxu0 %v118
  %v352 = vpop.f32.mrb[0].mxu0
  %v353 = vadd.f32 %v87, %v352
  %v354 = vpop.f32.mrb[0].mxu0
  %355 = vmatprep.mubr.f32.mxu0 0.0
  %356 = vmatmul.mubr.f32.gmra.mrb[0].mxu0 %v121
  %v357 = vpop.f32.mrb[0].mxu0
  %v358 = vadd.f32 %v87, %v357
  %v359 = vpop.f32.mrb[0].mxu0
  %360 = vmatprep.mubr.f32.mxu0 0.0
  %361 = vmatmul.mubr.f32.gmra.mrb[0].mxu0 %v124
  %v362 = vpop.f32.mrb[0].mxu0
  %v363 = vadd.f32 %v87, %v362
  %v364 = vpop.f32.mrb[0].mxu0
  %365 = vmatprep.mubr.f32.mxu0 0.0
  %366 = vmatmul.mubr.f32.gmra.mrb[0].mxu0 %v127
  %v367 = vpop.f32.mrb[0].mxu0
  %v368 = vadd.f32 %v87, %v367
  %v369 = vpop.f32.mrb[0].mxu0
  %370 = vmatprep.mubr.f32.mxu0 0.0
  %371 = vmatmul.mubr.f32.gmra.mrb[0].mxu0 %v130
  %v372 = vpop.f32.mrb[0].mxu0
  %v373 = vadd.f32 %v87, %v372
  %v374 = vpop.f32.mrb[0].mxu0
  %375 = vmatprep.mubr.f32.mxu0 0.0
  %376 = vmatmul.mubr.f32.gmra.mrb[0].mxu0 %v133
  %v377 = vpop.f32.mrb[0].mxu0
  %v378 = vadd.f32 %v87, %v377
  %v379 = vpop.f32.mrb[0].mxu0
  %380 = vmatprep.mubr.f32.mxu0 0.0
  %381 = vmatmul.mubr.f32.gmra.mrb[0].mxu0 %v136
  %v382 = vpop.f32.mrb[0].mxu0
  %v383 = vadd.f32 %v87, %v382
  %v384 = vpop.f32.mrb[0].mxu0
  %385 = vmatprep.mubr.f32.mxu0 0.0
  %386 = vmatmul.mubr.f32.gmra.mrb[0].mxu0 %v139
  %v387 = vpop.f32.mrb[0].mxu0
  %v388 = vadd.f32 %v87, %v387
  %v389 = vpop.f32.mrb[0].mxu0
  %390 = vmatprep.mubr.f32.mxu0 0.0
  %391 = vmatmul.mubr.f32.gmra.mrb[0].mxu0 %v142
  %v392 = vpop.f32.mrb[0].mxu0
  %v393 = vadd.f32 %v87, %v392
  %v394 = vpop.f32.mrb[0].mxu0
  %395 = vmatprep.mubr.f32.mxu0 0.0
  %396 = vmatmul.mubr.f32.gmra.mrb[0].mxu0 %v145
  %v397 = vpop.f32.mrb[0].mxu0
  %v398 = vadd.f32 %v87, %v397
  %v399 = vpop.f32.mrb[0].mxu0
  %400 = vmatprep.mubr.f32.mxu0 0.0
  %401 = vmatmul.mubr.f32.gmra.mrb[0].mxu0 %v148
  %v402 = vpop.f32.mrb[0].mxu0
  %v403 = vadd.f32 %v87, %v402
  %v404 = vpop.f32.mrb[0].mxu0
  %405 = vmatprep.mubr.f32.mxu0 0.0
  %406 = vmatmul.mubr.f32.gmra.mrb[0].mxu0 %v151
  %v407 = vpop.f32.mrb[0].mxu0
  %v408 = vadd.f32 %v87, %v407
  %v409 = vpop.f32.mrb[0].mxu0
  %410 = vmatprep.mubr.f32.mxu0 0.0
  %411 = vmatmul.mubr.f32.gmra.mrb[0].mxu0 %v154
  %v412 = vpop.f32.mrb[0].mxu0
  %v413 = vadd.f32 %v87, %v412
  %v414 = vpop.f32.mrb[0].mxu0
  %415 = vmatprep.mubr.f32.mxu0 0.0
  %416 = vmatmul.mubr.f32.gmra.mrb[0].mxu0 %v157
  %v417 = vpop.f32.mrb[0].mxu0
  %v418 = vadd.f32 %v87, %v417
  %v419 = vpop.f32.mrb[0].mxu0
  %420 = vmatprep.mubr.f32.mxu0 0.0
  %421 = vmatmul.mubr.f32.gmra.mrb[0].mxu0 %v160
  %v422 = vpop.f32.mrb[0].mxu0
  %v423 = vadd.f32 %v87, %v422
  %v424 = vpop.f32.mrb[0].mxu0
  %425 = vmatprep.mubr.f32.mxu0 0.0
  %426 = vmatmul.mubr.f32.gmra.mrb[0].mxu0 %v163
  %v427 = vpop.f32.mrb[0].mxu0
  %v428 = vadd.f32 %v87, %v427
  %v429 = vpop.f32.mrb[0].mxu0
  %430 = vmatprep.mubr.f32.mxu0 0.0
  %431 = vmatmul.mubr.f32.gmra.mrb[0].mxu0 %v166
  %v432 = vpop.f32.mrb[0].mxu0
  %v433 = vadd.f32 %v87, %v432
  %v434 = vpop.f32.mrb[0].mxu0
  %435 = vmatprep.mubr.f32.mxu0 0.0
  %436 = vmatmul.mubr.f32.gmra.mrb[0].mxu0 %v169
  %v437 = vpop.f32.mrb[0].mxu0
  %v438 = vadd.f32 %v87, %v437
  %v439 = vpop.f32.mrb[0].mxu0
  %440 = vmatprep.mubr.f32.mxu0 0.0
  %441 = vmatmul.mubr.f32.gmra.mrb[0].mxu0 %v172
  %v442 = vpop.f32.mrb[0].mxu0
  %v443 = vadd.f32 %v87, %v442
  %v444 = vpop.f32.mrb[0].mxu0
  %445 = vmatprep.mubr.f32.mxu0 0.0
  %446 = vmatmul.mubr.f32.gmra.mrb[0].mxu0 %v175
  %v447 = vpop.f32.mrb[0].mxu0
  %v448 = vadd.f32 %v87, %v447
  %v449 = vpop.f32.mrb[0].mxu0
  %450 = vmatprep.mubr.f32.mxu0 0.0
  %451 = vmatmul.mubr.f32.gmra.mrb[0].mxu0 %v178
  %v452 = vpop.f32.mrb[0].mxu0
  %v453 = vadd.f32 %v87, %v452
  %v454 = vpop.f32.mrb[0].mxu0
  %455 = vmatprep.mubr.f32.mxu0 0.0
  %456 = vmatmul.mubr.f32.gmra.mrb[0].mxu0 %v181
  %v457 = vpop.f32.mrb[0].mxu0
  %v458 = vadd.f32 %v87, %v457
  %v459 = vpop.f32.mrb[0].mxu0
  %460 = vmatprep.mubr.f32.mxu0 0.0
  %461 = vmatmul.mubr.f32.gmra.mrb[0].mxu0 %v184
  %v462 = vpop.f32.mrb[0].mxu0
  %v463 = vadd.f32 %v87, %v462
  %v464 = vpop.f32.mrb[0].mxu0
  %465 = vmatprep.mubr.f32.mxu0 0.0
  %466 = vmatmul.mubr.f32.gmra.mrb[0].mxu0 %v187
  %v467 = vpop.f32.mrb[0].mxu0
  %v468 = vadd.f32 %v87, %v467
  %v469 = vpop.f32.mrb[0].mxu0
  %470 = vmatprep.mubr.f32.mxu0 0.0
  %471 = vmatmul.mubr.f32.gmra.mrb[0].mxu0 %v190
  %v472 = vpop.f32.mrb[0].mxu0
  %v473 = vadd.f32 %v87, %v472
  %v474 = vpop.f32.mrb[0].mxu0
  %475 = vmatprep.mubr.f32.mxu0 0.0
  %476 = vmatmul.mubr.f32.gmra.mrb[0].mxu0 %v193
  %v477 = vpop.f32.mrb[0].mxu0
  %v478 = vadd.f32 %v87, %v477
  %v479 = vpop.f32.mrb[0].mxu0
  %480 = vmatprep.mubr.f32.mxu0 0.0
  %481 = vmatmul.mubr.f32.gmra.mrb[0].mxu0 %v196
  %v482 = vpop.f32.mrb[0].mxu0
  %v483 = vadd.f32 %v87, %v482
  %v484 = vpop.f32.mrb[0].mxu0
  %485 = vmatprep.mubr.f32.mxu0 0.0
  %486 = vmatmul.mubr.f32.gmra.mrb[0].mxu0 %v199
  %v487 = vpop.f32.mrb[0].mxu0
  %v488 = vadd.f32 %v87, %v487
  %v489 = vpop.f32.mrb[0].mxu0
  %490 = vmatprep.mubr.f32.mxu0 0.0
  %491 = vmatmul.mubr.f32.gmra.mrb[0].mxu0 %v202
  %v492 = vpop.f32.mrb[0].mxu0
  %v493 = vadd.f32 %v87, %v492
  %v494 = vpop.f32.mrb[0].mxu0
  %495 = vmatprep.mubr.f32.mxu0 0.0
  %496 = vmatmul.mubr.f32.gmra.mrb[0].mxu0 %v205
  %v497 = vpop.f32.mrb[0].mxu0
  %v498 = vadd.f32 %v87, %v497
  %v499 = vpop.f32.mrb[0].mxu0
  %500 = vmatprep.mubr.f32.mxu0 0.0
  %501 = vmatmul.mubr.f32.gmra.mrb[0].mxu0 %v208
  %v502 = vpop.f32.mrb[0].mxu0
  %v503 = vadd.f32 %v87, %v502
  %v504 = vpop.f32.mrb[0].mxu0
  %505 = vmatprep.mubr.f32.mxu0 0.0
  %506 = vmatmul.mubr.f32.gmra.mrb[0].mxu0 %v211
  %v507 = vpop.f32.mrb[0].mxu0
  %v508 = vadd.f32 %v87, %v507
  %v509 = vpop.f32.mrb[0].mxu0
  %510 = vmatprep.mubr.f32.mxu0 0.0
  %511 = vmatmul.mubr.f32.gmra.mrb[0].mxu0 %v214
  %v512 = vpop.f32.mrb[0].mxu0
  %v513 = vadd.f32 %v87, %v512
  %v514 = vpop.f32.mrb[0].mxu0
  %515 = vmatprep.mubr.f32.mxu0 0.0
  %516 = vmatmul.mubr.f32.gmra.mrb[0].mxu0 %v217
  %v517 = vpop.f32.mrb[0].mxu0
  %v518 = vadd.f32 %v87, %v517
  %v519 = vpop.f32.mrb[0].mxu0
  %520 = vmatprep.mubr.f32.mxu0 0.0
  %521 = vmatmul.mubr.f32.gmra.mrb[0].mxu0 %v220
  %v522 = vpop.f32.mrb[0].mxu0
  %v523 = vadd.f32 %v87, %v522
  %v524 = vpop.f32.mrb[0].mxu0
  %525 = vmatprep.mubr.f32.mxu0 0.0
  %526 = vmatmul.mubr.f32.gmra.mrb[0].mxu0 %v223
  %v527 = vpop.f32.mrb[0].mxu0
  %v528 = vadd.f32 %v87, %v527
  %v529 = vpop.f32.mrb[0].mxu0
  %530 = vmatprep.mubr.f32.mxu0 0.0
  %531 = vmatmul.mubr.f32.gmra.mrb[0].mxu0 %v226
  %v532 = vpop.f32.mrb[0].mxu0
  %v533 = vadd.f32 %v87, %v532
  %v534 = vpop.f32.mrb[0].mxu0
  %535 = vmatprep.mubr.f32.mxu0 0.0
  %536 = vmatmul.mubr.f32.gmra.mrb[0].mxu0 %v229
  %v537 = vpop.f32.mrb[0].mxu0
  %v538 = vadd.f32 %v87, %v537
  %v539 = vpop.f32.mrb[0].mxu0
  %540 = vmatprep.mubr.f32.mxu0 0.0
  %541 = vmatmul.mubr.f32.gmra.mrb[0].mxu0 %v232
  %v542 = vpop.f32.mrb[0].mxu0
  %v543 = vadd.f32 %v87, %v542
  %v544 = vpop.f32.mrb[0].mxu0
  %545 = vmatprep.mubr.f32.mxu0 0.0
  %546 = vmatmul.mubr.f32.gmra.mrb[0].mxu0 %v235
  %v547 = vpop.f32.mrb[0].mxu0
  %v548 = vadd.f32 %v87, %v547
  %v549 = vpop.f32.mrb[0].mxu0
  %550 = vdwg.mxu0
  %v551 = vmax.f32 %v308, 0.0
  %v552 = vmax.f32 %v313, 0.0
  %v553 = vmax.f32 %v318, 0.0
  %v554 = vmax.f32 %v323, 0.0
  %v555 = vmax.f32 %v328, 0.0
  %v556 = vmax.f32 %v333, 0.0
  %v557 = vmax.f32 %v338, 0.0
  %v558 = vmax.f32 %v343, 0.0
  %v559 = vmax.f32 %v348, 0.0
  %v560 = vmax.f32 %v353, 0.0
  %v561 = vmax.f32 %v358, 0.0
  %v562 = vmax.f32 %v363, 0.0
  %v563 = vmax.f32 %v368, 0.0
  %v564 = vmax.f32 %v373, 0.0
  %v565 = vmax.f32 %v378, 0.0
  %v566 = vmax.f32 %v383, 0.0
  %v567 = vmax.f32 %v388, 0.0
  %v568 = vmax.f32 %v393, 0.0
  %v569 = vmax.f32 %v398, 0.0
  %v570 = vmax.f32 %v403, 0.0
  %v571 = vmax.f32 %v408, 0.0
  %v572 = vmax.f32 %v413, 0.0
  %v573 = vmax.f32 %v418, 0.0
  %v574 = vmax.f32 %v423, 0.0
  %v575 = vmax.f32 %v428, 0.0
  %v576 = vmax.f32 %v433, 0.0
  %v577 = vmax.f32 %v438, 0.0
  %v578 = vmax.f32 %v443, 0.0
  %v579 = vmax.f32 %v448, 0.0
  %v580 = vmax.f32 %v453, 0.0
  %v581 = vmax.f32 %v458, 0.0
  %v582 = vmax.f32 %v463, 0.0
  %v583 = vmax.f32 %v468, 0.0
  %v584 = vmax.f32 %v473, 0.0
  %v585 = vmax.f32 %v478, 0.0
  %v586 = vmax.f32 %v483, 0.0
  %v587 = vmax.f32 %v488, 0.0
  %v588 = vmax.f32 %v493, 0.0
  %v589 = vmax.f32 %v498, 0.0
  %v590 = vmax.f32 %v503, 0.0
  %v591 = vmax.f32 %v508, 0.0
  %v592 = vmax.f32 %v513, 0.0
  %v593 = vmax.f32 %v518, 0.0
  %v594 = vmax.f32 %v523, 0.0
  %v595 = vmax.f32 %v528, 0.0
  %v596 = vmax.f32 %v533, 0.0
  %v597 = vmax.f32 %v538, 0.0
  %v598 = vmax.f32 %v543, 0.0
  %v599 = vmax.f32 %v548, 0.0
  %v600 = vlaneseq
  %v601 = vshrl.u32 %v600, 7
  %v602 = vlaneseq
  %v603 = vand.u32 %v602, 127
  %v604 = vadd.s32 %v603, 128
  %v605 = vadd.s32 %v603, 256
  %v606 = vadd.s32 %v603, 384
  %v607 = vmul.u32 %v601, 196
  %vm608 = vcmp.ge.s32.totalorder %v603, %v607
  %vm609 = vcmp.ge.s32.totalorder %v604, %v607
  %vm610 = vcmp.ge.s32.totalorder %v605, %v607
  %vm611 = vcmp.ge.s32.totalorder %v606, %v607
  %v612 = vadd.s32 %v607, 196
  %vm613 = vcmp.lt.s32.totalorder %v603, %v612
  %vm614 = vcmp.lt.s32.totalorder %v604, %v612
  %vm615 = vcmp.lt.s32.totalorder %v605, %v612
  %vm616 = vcmp.lt.s32.totalorder %v606, %v612
  %vm617 = vmand %vm608, %vm613
  %vm618 = vmand %vm609, %vm614
  %vm619 = vmand %vm610, %vm615
  %vm620 = vmand %vm611, %vm616
  %v621 = vsel %vm617, 0.0051020407, 0.0
  %v622 = vsel %vm618, 0.0051020407, 0.0
  %v623 = vsel %vm619, 0.0051020407, 0.0
  %v624 = vsel %vm620, 0.0051020407, 0.0
  %vm625 = vcmask 64512
  %v627 = vsel %vm625, %v624, 0
  %629 = vmatprep.subr.mxu0 0.0
  %630 = vmatpush1.msra.mxu0 %v551
  %631 = vmatprep.subr.mxu0 0.0
  %632 = vmatpush1.msra.mxu0 %v552
  %633 = vmatprep.subr.mxu0 0.0
  %634 = vmatpush1.msra.mxu0 %v553
  %635 = vmatprep.subr.mxu0 0.0
  %636 = vmatpush1.msra.mxu0 %v554
  %637 = vmatprep.subr.mxu0 0.0
  %638 = vmatpush1.msra.mxu0 %v555
  %639 = vmatprep.subr.mxu0 0.0
  %640 = vmatpush1.msra.mxu0 %v556
  %641 = vmatprep.subr.mxu0 0.0
  %642 = vmatpush1.msra.mxu0 %v557
  %643 = vmatprep.subr.mxu0 0.0
  %644 = vmatpush1.msra.mxu0 %v558
  %645 = vmatprep.subr.mxu0 0.0
  %646 = vmatpush1.msra.mxu0 %v559
  %647 = vmatprep.subr.mxu0 0.0
  %648 = vmatpush1.msra.mxu0 %v560
  %649 = vmatprep.subr.mxu0 0.0
  %650 = vmatpush1.msra.mxu0 %v561
  %651 = vmatprep.subr.mxu0 0.0
  %652 = vmatpush1.msra.mxu0 %v562
  %653 = vmatprep.subr.mxu0 0.0
  %654 = vmatpush1.msra.mxu0 %v563
  %655 = vmatprep.subr.mxu0 0.0
  %656 = vmatpush1.msra.mxu0 %v564
  %657 = vmatprep.subr.mxu0 0.0
  %658 = vmatpush1.msra.mxu0 %v565
  %659 = vmatprep.subr.mxu0 0.0
  %660 = vmatpush1.msra.mxu0 %v566
  %661 = vmatprep.subr.mxu0 0.0
  %662 = vmatpush1.msra.mxu0 %v567
  %663 = vmatprep.subr.mxu0 0.0
  %664 = vmatpush1.msra.mxu0 %v568
  %665 = vmatprep.subr.mxu0 0.0
  %666 = vmatpush1.msra.mxu0 %v569
  %667 = vmatprep.subr.mxu0 0.0
  %668 = vmatpush1.msra.mxu0 %v570
  %669 = vmatprep.subr.mxu0 0.0
  %670 = vmatpush1.msra.mxu0 %v571
  %671 = vmatprep.subr.mxu0 0.0
  %672 = vmatpush1.msra.mxu0 %v572
  %673 = vmatprep.subr.mxu0 0.0
  %674 = vmatpush1.msra.mxu0 %v573
  %675 = vmatprep.subr.mxu0 0.0
  %676 = vmatpush1.msra.mxu0 %v574
  %677 = vmatprep.subr.mxu0 0.0
  %678 = vmatpush1.msra.mxu0 %v575
  %679 = vmatprep.subr.mxu0 0.0
  %680 = vmatpush1.msra.mxu0 %v576
  %681 = vmatprep.subr.mxu0 0.0
  %682 = vmatpush1.msra.mxu0 %v577
  %683 = vmatprep.subr.mxu0 0.0
  %684 = vmatpush1.msra.mxu0 %v578
  %685 = vmatprep.subr.mxu0 0.0
  %686 = vmatpush1.msra.mxu0 %v579
  %687 = vmatprep.subr.mxu0 0.0
  %688 = vmatpush1.msra.mxu0 %v580
  %689 = vmatprep.subr.mxu0 0.0
  %690 = vmatpush1.msra.mxu0 %v581
  %691 = vmatprep.subr.mxu0 0.0
  %692 = vmatpush1.msra.mxu0 %v582
  %693 = vmatprep.mubr.f32.mxu0 %v622
  %694 = vmatmul.mubr.f32.gmra.mrb[0].mxu0 %v621
  %v695 = vpop.f32.mrb[0].mxu0
  %v696 = vadd.f32 0.0, %v695
  %v697 = vpop.f32.mrb[0].mxu0
  %698 = vdwg.mxu0
  %699 = vmatprep.subr.mxu0 0.0
  %700 = vmatpush1.msra.mxu0 %v583
  %701 = vmatprep.subr.mxu0 0.0
  %702 = vmatpush1.msra.mxu0 %v584
  %703 = vmatprep.subr.mxu0 0.0
  %704 = vmatpush1.msra.mxu0 %v585
  %705 = vmatprep.subr.mxu0 0.0
  %706 = vmatpush1.msra.mxu0 %v586
  %707 = vmatprep.subr.mxu0 0.0
  %708 = vmatpush1.msra.mxu0 %v587
  %709 = vmatprep.subr.mxu0 0.0
  %710 = vmatpush1.msra.mxu0 %v588
  %711 = vmatprep.subr.mxu0 0.0
  %712 = vmatpush1.msra.mxu0 %v589
  %713 = vmatprep.subr.mxu0 0.0
  %714 = vmatpush1.msra.mxu0 %v590
  %715 = vmatprep.subr.mxu0 0.0
  %716 = vmatpush1.msra.mxu0 %v591
  %717 = vmatprep.subr.mxu0 0.0
  %718 = vmatpush1.msra.mxu0 %v592
  %719 = vmatprep.subr.mxu0 0.0
  %720 = vmatpush1.msra.mxu0 %v593
  %721 = vmatprep.subr.mxu0 0.0
  %722 = vmatpush1.msra.mxu0 %v594
  %723 = vmatprep.subr.mxu0 0.0
  %724 = vmatpush1.msra.mxu0 %v595
  %725 = vmatprep.subr.mxu0 0.0
  %726 = vmatpush1.msra.mxu0 %v596
  %727 = vmatprep.subr.mxu0 0.0
  %728 = vmatpush1.msra.mxu0 %v597
  %729 = vmatprep.subr.mxu0 0.0
  %730 = vmatpush1.msra.mxu0 %v598
  %731 = vmatprep.subr.mxu0 0.0
  %732 = vmatpush1.msra.mxu0 %v599
  %733 = vmatprep.subr.mxu0 0.0
  %734 = vmatpush1.msra.mxu0 0.0
  %735 = vmatprep.subr.mxu0 0.0
  %736 = vmatpush1.msra.mxu0 0.0
  %737 = vmatprep.subr.mxu0 0.0
  %738 = vmatpush1.msra.mxu0 0.0
  %739 = vmatprep.subr.mxu0 0.0
  %740 = vmatpush1.msra.mxu0 0.0
  %741 = vmatprep.subr.mxu0 0.0
  %742 = vmatpush1.msra.mxu0 0.0
  %743 = vmatprep.subr.mxu0 0.0
  %744 = vmatpush1.msra.mxu0 0.0
  %745 = vmatprep.subr.mxu0 0.0
  %746 = vmatpush1.msra.mxu0 0.0
  %747 = vmatprep.subr.mxu0 0.0
  %748 = vmatpush1.msra.mxu0 0.0
  %749 = vmatprep.subr.mxu0 0.0
  %750 = vmatpush1.msra.mxu0 0.0
  %751 = vmatprep.subr.mxu0 0.0
  %752 = vmatpush1.msra.mxu0 0.0
  %753 = vmatprep.subr.mxu0 0.0
  %754 = vmatpush1.msra.mxu0 0.0
  %755 = vmatprep.subr.mxu0 0.0
  %756 = vmatpush1.msra.mxu0 0.0
  %757 = vmatprep.subr.mxu0 0.0
  %758 = vmatpush1.msra.mxu0 0.0
  %759 = vmatprep.subr.mxu0 0.0
  %760 = vmatpush1.msra.mxu0 0.0
  %761 = vmatprep.subr.mxu0 0.0
  %762 = vmatpush1.msra.mxu0 0.0
  %763 = vmatprep.mubr.f32.mxu0 %v627
  %764 = vmatmul.mubr.f32.gmra.mrb[0].mxu0 %v623
  %v765 = vpop.f32.mrb[0].mxu0
  %v766 = vadd.f32 %v696, %v765
  %v767 = vpop.f32.mrb[0].mxu0
  %768 = vdwg.mxu0
  %v769 = vld [vmem:[%s3] sm:$0xff]
  %v770 = vld [vmem:[%s3 + $0x8] sm:$0x3]
  %v771 = vld [vmem:[%s4] sm:$0x1]
  %v773 = vlaneseq
  %v774 = vshrl.u32 %v773, 7
  %v775 = vsub.s32 0, %v774
  %v776 = vrot.slane %v771, %v775
  %vm778 = vcmask 80896
  %v780 = vsel %vm778, %v766, 0
  %vm782 = vcmask 1041408
  %v784 = vsel %vm782, %v770, 0
  %786 = vmatprep.subr.mxu0 0.0
  %787 = vmatpush1.msra.mxu0 %v769
  %788 = vmatprep.subr.mxu0 0.0
  %789 = vmatpush1.msra.mxu0 %v784
  %790 = vmatprep.subr.mxu0 0.0
  %791 = vmatpush1.msra.mxu0 0.0
  %792 = vmatprep.subr.mxu0 0.0
  %793 = vmatpush1.msra.mxu0 0.0
  %794 = vmatprep.subr.mxu0 0.0
  %795 = vmatpush1.msra.mxu0 0.0
  %796 = vmatprep.subr.mxu0 0.0
  %797 = vmatpush1.msra.mxu0 0.0
  %798 = vmatprep.subr.mxu0 0.0
  %799 = vmatpush1.msra.mxu0 0.0
  %800 = vmatprep.subr.mxu0 0.0
  %801 = vmatpush1.msra.mxu0 0.0
  %802 = vmatprep.subr.mxu0 0.0
  %803 = vmatpush1.msra.mxu0 0.0
  %804 = vmatprep.subr.mxu0 0.0
  %805 = vmatpush1.msra.mxu0 0.0
  %806 = vmatprep.subr.mxu0 0.0
  %807 = vmatpush1.msra.mxu0 0.0
  %808 = vmatprep.subr.mxu0 0.0
  %809 = vmatpush1.msra.mxu0 0.0
  %810 = vmatprep.subr.mxu0 0.0
  %811 = vmatpush1.msra.mxu0 0.0
  %812 = vmatprep.subr.mxu0 0.0
  %813 = vmatpush1.msra.mxu0 0.0
  %814 = vmatprep.subr.mxu0 0.0
  %815 = vmatpush1.msra.mxu0 0.0
  %816 = vmatprep.subr.mxu0 0.0
  %817 = vmatpush1.msra.mxu0 0.0
  %818 = vmatprep.subr.mxu0 0.0
  %819 = vmatpush1.msra.mxu0 0.0
  %820 = vmatprep.subr.mxu0 0.0
  %821 = vmatpush1.msra.mxu0 0.0
  %822 = vmatprep.subr.mxu0 0.0
  %823 = vmatpush1.msra.mxu0 0.0
  %824 = vmatprep.subr.mxu0 0.0
  %825 = vmatpush1.msra.mxu0 0.0
  %826 = vmatprep.subr.mxu0 0.0
  %827 = vmatpush1.msra.mxu0 0.0
  %828 = vmatprep.subr.mxu0 0.0
  %829 = vmatpush1.msra.mxu0 0.0
  %830 = vmatprep.subr.mxu0 0.0
  %831 = vmatpush1.msra.mxu0 0.0
  %832 = vmatprep.subr.mxu0 0.0
  %833 = vmatpush1.msra.mxu0 0.0
  %834 = vmatprep.subr.mxu0 0.0
  %835 = vmatpush1.msra.mxu0 0.0
  %836 = vmatprep.subr.mxu0 0.0
  %837 = vmatpush1.msra.mxu0 0.0
  %838 = vmatprep.subr.mxu0 0.0
  %839 = vmatpush1.msra.mxu0 0.0
  %840 = vmatprep.subr.mxu0 0.0
  %841 = vmatpush1.msra.mxu0 0.0
  %842 = vmatprep.subr.mxu0 0.0
  %843 = vmatpush1.msra.mxu0 0.0
  %844 = vmatprep.subr.mxu0 0.0
  %845 = vmatpush1.msra.mxu0 0.0
  %846 = vmatprep.subr.mxu0 0.0
  %847 = vmatpush1.msra.mxu0 0.0
  %848 = vmatprep.subr.mxu0 0.0
  %849 = vmatpush1.msra.mxu0 0.0
  %850 = vmatprep.mubr.f32.mxu0 0.0
  %851 = vmatmul.mubr.f32.gmra.mrb[0].mxu0 %v780
  %v852 = vpop.f32.mrb[0].mxu0
  %v853 = vadd.f32 %v776, %v852
  %v854 = vpop.f32.mrb[0].mxu0
  %855 = vdwg.mxu0
  %v856 = vmax.f32 %v853, 0.0
  %v857 = vld [vmem:[%s5] sm:$0x3f]
  %v858 = vld [vmem:[#allocation2] sm:$0x1]
  %v860 = vlaneseq
  %v861 = vshrl.u32 %v860, 7
  %v862 = vsub.s32 0, %v861
  %v863 = vrot.slane %v858, %v862
  %vm865 = vcmask 48128
  %v867 = vsel %vm865, %v856, 0
  %vm869 = vcmask 1045504
  %v871 = vsel %vm869, %v857, 0
  %873 = vmatprep.subr.mxu0 0.0
  %874 = vmatpush1.msra.mxu0 %v871
  %875 = vmatprep.subr.mxu0 0.0
  %876 = vmatpush1.msra.mxu0 0.0
  %877 = vmatprep.subr.mxu0 0.0
  %878 = vmatpush1.msra.mxu0 0.0
  %879 = vmatprep.subr.mxu0 0.0
  %880 = vmatpush1.msra.mxu0 0.0
  %881 = vmatprep.subr.mxu0 0.0
  %882 = vmatpush1.msra.mxu0 0.0
  %883 = vmatprep.subr.mxu0 0.0
  %884 = vmatpush1.msra.mxu0 0.0
  %885 = vmatprep.subr.mxu0 0.0
  %886 = vmatpush1.msra.mxu0 0.0
  %887 = vmatprep.subr.mxu0 0.0
  %888 = vmatpush1.msra.mxu0 0.0
  %889 = vmatprep.subr.mxu0 0.0
  %890 = vmatpush1.msra.mxu0 0.0
  %891 = vmatprep.subr.mxu0 0.0
  %892 = vmatpush1.msra.mxu0 0.0
  %893 = vmatprep.subr.mxu0 0.0
  %894 = vmatpush1.msra.mxu0 0.0
  %895 = vmatprep.subr.mxu0 0.0
  %896 = vmatpush1.msra.mxu0 0.0
  %897 = vmatprep.subr.mxu0 0.0
  %898 = vmatpush1.msra.mxu0 0.0
  %899 = vmatprep.subr.mxu0 0.0
  %900 = vmatpush1.msra.mxu0 0.0
  %901 = vmatprep.subr.mxu0 0.0
  %902 = vmatpush1.msra.mxu0 0.0
  %903 = vmatprep.subr.mxu0 0.0
  %904 = vmatpush1.msra.mxu0 0.0
  %905 = vmatprep.subr.mxu0 0.0
  %906 = vmatpush1.msra.mxu0 0.0
  %907 = vmatprep.subr.mxu0 0.0
  %908 = vmatpush1.msra.mxu0 0.0
  %909 = vmatprep.subr.mxu0 0.0
  %910 = vmatpush1.msra.mxu0 0.0
  %911 = vmatprep.subr.mxu0 0.0
  %912 = vmatpush1.msra.mxu0 0.0
  %913 = vmatprep.subr.mxu0 0.0
  %914 = vmatpush1.msra.mxu0 0.0
  %915 = vmatprep.subr.mxu0 0.0
  %916 = vmatpush1.msra.mxu0 0.0
  %917 = vmatprep.subr.mxu0 0.0
  %918 = vmatpush1.msra.mxu0 0.0
  %919 = vmatprep.subr.mxu0 0.0
  %920 = vmatpush1.msra.mxu0 0.0
  %921 = vmatprep.subr.mxu0 0.0
  %922 = vmatpush1.msra.mxu0 0.0
  %923 = vmatprep.subr.mxu0 0.0
  %924 = vmatpush1.msra.mxu0 0.0
  %925 = vmatprep.subr.mxu0 0.0
  %926 = vmatpush1.msra.mxu0 0.0
  %927 = vmatprep.subr.mxu0 0.0
  %928 = vmatpush1.msra.mxu0 0.0
  %929 = vmatprep.subr.mxu0 0.0
  %930 = vmatpush1.msra.mxu0 0.0
  %931 = vmatprep.subr.mxu0 0.0
  %932 = vmatpush1.msra.mxu0 0.0
  %933 = vmatprep.subr.mxu0 0.0
  %934 = vmatpush1.msra.mxu0 0.0
  %935 = vmatprep.subr.mxu0 0.0
  %936 = vmatpush1.msra.mxu0 0.0
  %937 = vmatprep.mubr.f32.mxu0 0.0
  %938 = vmatmul.mubr.f32.gmra.mrb[0].mxu0 %v867
  %v939 = vpop.f32.mrb[0].mxu0
  %v940 = vadd.f32 %v863, %v939
  %v941 = vpop.f32.mrb[0].mxu0
  %942 = vdwg.mxu0
  %v943 = vxor.u32 %v940, 2147483648
  %v944 = vmul.f32 %v943, 1.442695
  %v945 = vpow.pop %v944
  %v946 = vadd.f32 %v945, 1.0
  %v947 = vrcp.pop %v946
  %v948 = vmul.f32 1.0, %v947
  %vm949 = vcmask 1024
  %950 = vst.msk [vmem:[%s7] sm:$0x3] %vm949, %v948
  // Predicated region
  $region30: #{router_forward.1} parent=0 // pred_check
    _
  $region31: #{router_forward.1} parent=0 // pred_check_branch
    %952 = sbr.rel (0) target = $region33
  $region32: #{router_forward.1} parent=0 // pred_region
    _
  $region33: #{router_forward.1} parent=0 // pred_fallthru
    _
  // Predicated region
  $region34: #{router_forward.1} parent=0 // pred_check
    _
  $region35: #{router_forward.1} parent=0 // pred_check_branch
    %954 = sbr.rel (0) target = $region37
  $region36: #{router_forward.1} parent=0 // pred_region
    _
  $region37: #{router_forward.1} parent=0 // pred_fallthru
    _

</llo_original>
